<compile_context>
chip_gen: v5e
topology: v5e:2x2
jax: 0.10.0
libtpu: 0.0.40
codegen_flags: <defaults>
</compile_context>

<pallas_src>
import jax
import jax.numpy as jnp
from jax.experimental import pallas as pl
from jax.experimental.pallas import tpu as pltpu


def _align_conv_kernel(x_ref, w_ref, b_ref, o_ref):
    """1x1 conv tile: channels on sublanes, spatial on lanes.

    x_ref: (1, c_in,  tile_S)   input tile  (lane-dense along S)
    w_ref: (c_out, c_in)        full weight
    b_ref: (c_out, 1)           bias column
    o_ref: (1, c_out, tile_S)   output tile (lane-dense along S)
    """
    c_out, c_in = w_ref.shape
    tile_s = x_ref.shape[-1]

    x = x_ref[0].astype(jnp.float32)                    # (c_in, tile_S)
    w = w_ref[...].astype(jnp.float32)                  # (c_out, c_in)

    # Start the accumulator from the bias, broadcast along the lane (spatial) axis.
    acc = jnp.broadcast_to(b_ref[...].astype(jnp.float32), (c_out, tile_s))

    if c_in <= 64:
        # Tiny channel contraction: unrolled VPU broadcast-MAC keeps the critical
        # path off the MXU fill/pop latency (kernel is HBM-bound either way).
        for c in range(c_in):
            acc = acc + w[:, c:c + 1] * x[c:c + 1, :]   # (c_out,1)*(1,S) -> (c_out,S)
    else:
        acc = acc + jnp.dot(w, x, preferred_element_type=jnp.float32)

    o_ref[0] = acc.astype(o_ref.dtype)


def _pick_tile_s(s_total, cap=16384):
    """Largest lane-dense tile along S: a multiple of 128 that divides S (capped).

    Falls back to the full extent (always a legal block shape) when S is small or
    has no suitable divisor, so no padding copy is ever needed.
    """
    if s_total <= cap:
        return s_total
    if s_total % 128 != 0:
        return s_total  # TODO(synk): could mask a ragged tail instead of one big block
    best = 128
    t = 256
    while t <= cap:
        if s_total % t == 0:
            best = t
        t += 128
    return best


def _align_conv_1x1(x3, weight2d, bias, tile_s=None):
    """x3: (N, c_in, S); weight2d: (c_out, c_in); bias: (c_out,) -> (N, c_out, S)."""
    n, c_in, s_total = x3.shape
    c_out = weight2d.shape[0]
    if tile_s is None:
        tile_s = _pick_tile_s(s_total)

    b_col = bias.reshape(c_out, 1)

    return pl.pallas_call(
        _align_conv_kernel,
        out_shape=jax.ShapeDtypeStruct((n, c_out, s_total), x3.dtype),
        grid_spec=pltpu.PrefetchScalarGridSpec(
            num_scalar_prefetch=0,
            grid=(n, s_total // tile_s),
            in_specs=[
                pl.BlockSpec((1, c_in, tile_s), lambda b, s: (b, 0, s)),
                pl.BlockSpec((c_out, c_in), lambda b, s: (0, 0)),
                pl.BlockSpec((c_out, 1), lambda b, s: (0, 0)),
            ],
            out_specs=pl.BlockSpec((1, c_out, tile_s), lambda b, s: (b, 0, s)),
        ),
        compiler_params=pltpu.CompilerParams(
            dimension_semantics=("parallel", "parallel")),
    )(x3, weight2d, b_col)


def align_forward(x, weight, bias, c_in, c_out):
    """Forward pass of Align.

    x:      (N, c_in, T, V)   -- NCHW, like the PyTorch module
    weight: (c_out, c_in, 1, 1)
    bias:   (c_out,)
    """
    if c_in > c_out:
        n, _, t, v = x.shape
        x3 = x.reshape(n, c_in, t * v)                       # free contiguous reshape
        w2 = weight.reshape(c_out, c_in).astype(x.dtype)
        out3 = _align_conv_1x1(x3, w2, bias.astype(x.dtype))
        return out3.reshape(n, c_out, t, v)                  # free contiguous reshape
    elif c_in < c_out:
        # Zero-pad channels via lax.pad (no explicit zeros tensor + concat copy).
        pad_cfg = [(0, 0, 0), (0, c_out - c_in, 0), (0, 0, 0), (0, 0, 0)]
        return jax.lax.pad(x, jnp.zeros((), dtype=x.dtype), pad_cfg)
    else:
        return x


def _init_align_params(key, c_in, c_out, dtype=jnp.float32):
    """Deterministic Conv2d(c_in, c_out, kernel_size=(1,1)) parameters."""
    kw, kb = jax.random.split(key)
    fan_in = c_in * 1 * 1
    bound = 1.0 / jnp.sqrt(fan_in)
    weight = jax.random.uniform(kw, (c_out, c_in, 1, 1), dtype, -bound, bound)
    bias = jax.random.uniform(kb, (c_out,), dtype, -bound, bound)
    return weight, bias


if __name__ == "__main__":
    key = jax.random.PRNGKey(0)
    k_x1, k_x2, k_p = jax.random.split(key, 3)

    # Case 1: c_in > c_out  -> 1x1 conv path (Pallas kernel)
    c_in, c_out = 8, 4
    N, T, V = 2, 16, 16
    x = jax.random.normal(k_x1, (N, c_in, T, V), jnp.float32)
    weight, bias = _init_align_params(k_p, c_in, c_out)

    y = jax.block_until_ready(align_forward(x, weight, bias, c_in, c_out))

    # Reference: plain-JAX 1x1 conv (einsum over channels).
    y_ref = jnp.einsum("ncHW,oc->noHW", x, weight.reshape(c_out, c_in)) \
        + bias[None, :, None, None]
    assert y.shape == (N, c_out, T, V)
    assert jnp.allclose(y, y_ref, atol=1e-5, rtol=1e-5)

    # Case 2: c_in < c_out -> zero-pad channels
    c_in2, c_out2 = 4, 8
    x2 = jax.random.normal(k_x2, (N, c_in2, T, V), jnp.float32)
    w2, b2 = _init_align_params(k_p, c_in2, c_out2)
    y2 = jax.block_until_ready(align_forward(x2, w2, b2, c_in2, c_out2))
    assert y2.shape == (N, c_out2, T, V)
    assert jnp.allclose(y2[:, :c_in2], x2)
    assert jnp.all(y2[:, c_in2:] == 0)

    # Case 3: c_in == c_out -> identity
    y3 = jax.block_until_ready(align_forward(x2, w2, b2, c_in2, c_in2))
    assert jnp.allclose(y3, x2)

    print("KERNEL_OK")
</pallas_src>

<mosaic_0001>
module attributes {stable_mosaic.version = 11 : i64} {
  func.func @_align_conv_kernel(%arg0: i32, %arg1: i32, %arg2: memref<1x8x256xf32, #tpu.memory_space<vmem>>, %arg3: memref<4x8xf32, #tpu.memory_space<vmem>>, %arg4: memref<4x1xf32, #tpu.memory_space<vmem>>, %arg5: memref<1x4x256xf32, #tpu.memory_space<vmem>>) attributes {dimension_semantics = [#tpu.dimension_semantics<parallel>, #tpu.dimension_semantics<parallel>], iteration_bounds = array<i64: 2, 1>, scalar_prefetch = 0 : i64, scratch_operands = 0 : i64, tpu.core_type = #tpu.core_type<tc>, window_params = [{transform_indices = @transform_0, window_bounds = array<i64: 1, 8, 256>}, {pipeline_mode = #tpu.pipeline_mode<synchronous>, transform_indices = @transform_1, window_bounds = array<i64: 4, 8>}, {pipeline_mode = #tpu.pipeline_mode<synchronous>, transform_indices = @transform_2, window_bounds = array<i64: 4, 1>}, {transform_indices = @transform_3, window_bounds = array<i64: 1, 4, 256>}]} {
    %c0 = arith.constant 0 : index
    %c0_0 = arith.constant 0 : index
    %c0_1 = arith.constant 0 : index
    %0 = vector.load %arg2[%c0, %c0_0, %c0_1] : memref<1x8x256xf32, #tpu.memory_space<vmem>>, vector<1x8x256xf32>
    %1 = vector.shape_cast %0 : vector<1x8x256xf32> to vector<8x256xf32>
    %c0_2 = arith.constant 0 : index
    %c0_3 = arith.constant 0 : index
    %2 = vector.load %arg3[%c0_2, %c0_3] : memref<4x8xf32, #tpu.memory_space<vmem>>, vector<4x8xf32>
    %c0_4 = arith.constant 0 : index
    %c0_5 = arith.constant 0 : index
    %3 = vector.load %arg4[%c0_4, %c0_5] : memref<4x1xf32, #tpu.memory_space<vmem>>, vector<4x1xf32>
    %4 = vector.shape_cast %3 : vector<4x1xf32> to vector<4x1xf32>
    %5 = vector.broadcast %4 : vector<4x1xf32> to vector<4x256xf32>
    %6 = vector.extract_strided_slice %2 {offsets = [0, 0], sizes = [4, 1], strides = [1, 1]} : vector<4x8xf32> to vector<4x1xf32>
    %7 = vector.extract_strided_slice %1 {offsets = [0, 0], sizes = [1, 256], strides = [1, 1]} : vector<8x256xf32> to vector<1x256xf32>
    %8 = vector.broadcast %6 : vector<4x1xf32> to vector<4x256xf32>
    %9 = vector.broadcast %7 : vector<1x256xf32> to vector<4x256xf32>
    %10 = arith.mulf %8, %9 : vector<4x256xf32>
    %11 = arith.addf %5, %10 : vector<4x256xf32>
    %12 = vector.extract_strided_slice %2 {offsets = [0, 1], sizes = [4, 1], strides = [1, 1]} : vector<4x8xf32> to vector<4x1xf32>
    %13 = vector.extract_strided_slice %1 {offsets = [1, 0], sizes = [1, 256], strides = [1, 1]} : vector<8x256xf32> to vector<1x256xf32>
    %14 = vector.broadcast %12 : vector<4x1xf32> to vector<4x256xf32>
    %15 = vector.broadcast %13 : vector<1x256xf32> to vector<4x256xf32>
    %16 = arith.mulf %14, %15 : vector<4x256xf32>
    %17 = arith.addf %11, %16 : vector<4x256xf32>
    %18 = vector.extract_strided_slice %2 {offsets = [0, 2], sizes = [4, 1], strides = [1, 1]} : vector<4x8xf32> to vector<4x1xf32>
    %19 = vector.extract_strided_slice %1 {offsets = [2, 0], sizes = [1, 256], strides = [1, 1]} : vector<8x256xf32> to vector<1x256xf32>
    %20 = vector.broadcast %18 : vector<4x1xf32> to vector<4x256xf32>
    %21 = vector.broadcast %19 : vector<1x256xf32> to vector<4x256xf32>
    %22 = arith.mulf %20, %21 : vector<4x256xf32>
    %23 = arith.addf %17, %22 : vector<4x256xf32>
    %24 = vector.extract_strided_slice %2 {offsets = [0, 3], sizes = [4, 1], strides = [1, 1]} : vector<4x8xf32> to vector<4x1xf32>
    %25 = vector.extract_strided_slice %1 {offsets = [3, 0], sizes = [1, 256], strides = [1, 1]} : vector<8x256xf32> to vector<1x256xf32>
    %26 = vector.broadcast %24 : vector<4x1xf32> to vector<4x256xf32>
    %27 = vector.broadcast %25 : vector<1x256xf32> to vector<4x256xf32>
    %28 = arith.mulf %26, %27 : vector<4x256xf32>
    %29 = arith.addf %23, %28 : vector<4x256xf32>
    %30 = vector.extract_strided_slice %2 {offsets = [0, 4], sizes = [4, 1], strides = [1, 1]} : vector<4x8xf32> to vector<4x1xf32>
    %31 = vector.extract_strided_slice %1 {offsets = [4, 0], sizes = [1, 256], strides = [1, 1]} : vector<8x256xf32> to vector<1x256xf32>
    %32 = vector.broadcast %30 : vector<4x1xf32> to vector<4x256xf32>
    %33 = vector.broadcast %31 : vector<1x256xf32> to vector<4x256xf32>
    %34 = arith.mulf %32, %33 : vector<4x256xf32>
    %35 = arith.addf %29, %34 : vector<4x256xf32>
    %36 = vector.extract_strided_slice %2 {offsets = [0, 5], sizes = [4, 1], strides = [1, 1]} : vector<4x8xf32> to vector<4x1xf32>
    %37 = vector.extract_strided_slice %1 {offsets = [5, 0], sizes = [1, 256], strides = [1, 1]} : vector<8x256xf32> to vector<1x256xf32>
    %38 = vector.broadcast %36 : vector<4x1xf32> to vector<4x256xf32>
    %39 = vector.broadcast %37 : vector<1x256xf32> to vector<4x256xf32>
    %40 = arith.mulf %38, %39 : vector<4x256xf32>
    %41 = arith.addf %35, %40 : vector<4x256xf32>
    %42 = vector.extract_strided_slice %2 {offsets = [0, 6], sizes = [4, 1], strides = [1, 1]} : vector<4x8xf32> to vector<4x1xf32>
    %43 = vector.extract_strided_slice %1 {offsets = [6, 0], sizes = [1, 256], strides = [1, 1]} : vector<8x256xf32> to vector<1x256xf32>
    %44 = vector.broadcast %42 : vector<4x1xf32> to vector<4x256xf32>
    %45 = vector.broadcast %43 : vector<1x256xf32> to vector<4x256xf32>
    %46 = arith.mulf %44, %45 : vector<4x256xf32>
    %47 = arith.addf %41, %46 : vector<4x256xf32>
    %48 = vector.extract_strided_slice %2 {offsets = [0, 7], sizes = [4, 1], strides = [1, 1]} : vector<4x8xf32> to vector<4x1xf32>
    %49 = vector.extract_strided_slice %1 {offsets = [7, 0], sizes = [1, 256], strides = [1, 1]} : vector<8x256xf32> to vector<1x256xf32>
    %50 = vector.broadcast %48 : vector<4x1xf32> to vector<4x256xf32>
    %51 = vector.broadcast %49 : vector<1x256xf32> to vector<4x256xf32>
    %52 = arith.mulf %50, %51 : vector<4x256xf32>
    %53 = arith.addf %47, %52 : vector<4x256xf32>
    %c0_6 = arith.constant 0 : index
    %c0_7 = arith.constant 0 : index
    %c0_8 = arith.constant 0 : index
    %54 = vector.load %arg5[%c0_6, %c0_7, %c0_8] : memref<1x4x256xf32, #tpu.memory_space<vmem>>, vector<1x4x256xf32>
    %55 = vector.shape_cast %54 : vector<1x4x256xf32> to vector<4x256xf32>
    %56 = vector.shape_cast %53 : vector<4x256xf32> to vector<1x4x256xf32>
    tpu.vector_store %arg5[%c0_6, %c0_7, %c0_8], %56 {strides = array<i32>} : memref<1x4x256xf32, #tpu.memory_space<vmem>>, vector<1x4x256xf32>,
    return
  }
  func.func @transform_0(%arg0: i32, %arg1: i32) -> (i32, i32, i32) {
    %c0_i32 = arith.constant 0 : i32
    %c0_i32_0 = arith.constant 0 : i32
    return %arg0, %c0_i32, %arg1 : i32, i32, i32
  }
  func.func @transform_1(%arg0: i32, %arg1: i32) -> (i32, i32) {
    %c0_i32 = arith.constant 0 : i32
    %c0_i32_0 = arith.constant 0 : i32
    %c0_i32_1 = arith.constant 0 : i32
    return %c0_i32, %c0_i32_0 : i32, i32
  }
  func.func @transform_2(%arg0: i32, %arg1: i32) -> (i32, i32) {
    %c0_i32 = arith.constant 0 : i32
    %c0_i32_0 = arith.constant 0 : i32
    %c0_i32_1 = arith.constant 0 : i32
    return %c0_i32, %c0_i32_0 : i32, i32
  }
  func.func @transform_3(%arg0: i32, %arg1: i32) -> (i32, i32, i32) {
    %c0_i32 = arith.constant 0 : i32
    %c0_i32_0 = arith.constant 0 : i32
    return %arg0, %c0_i32, %arg1 : i32, i32, i32
  }
}

</mosaic_0001>

<llo_original>
// kernel: tpu_custom_call.1
$region0: #{tpu_custom_call.1}
  #allocation0 [shape = 'u32[]', space=smem, size = 0x4, offset = 0x4, fixed_abs, tag = 'smem constant byte address 0x4 - core index']
  #allocation1 [shape = 'u32[72,128]{1,0:T(1,128)}', space=vmem, size = 0x9000, scoped, tag = 'internal scratch']
  %s0 = inlined_call_operand.hbm [shape: f32[2,8,256], index: 0, kind: input, shape index: {}]
  %s1 = inlined_call_operand.vmem [shape: f32[4,8], index: 1, kind: input, shape index: {}]
  %s2 = inlined_call_operand.vmem [shape: f32[4,1], index: 2, kind: input, shape index: {}]
  %s3 = inlined_call_operand.hbm [shape: f32[2,4,256], index: 3, kind: output, shape index: {}]
  %s4 = sld [smem:[#allocation0]]
  $region49: #{tpu_custom_call.1} parent=0
    _
  %s6 = ssub.s32 1, %s4
  %s7 = scalar_select 0, %s6, %s4
  $region1: #{tpu_custom_call.1} parent=0
    #allocation2 [shape = 'u8[16384]{0}', space=vmem, size = 0x4000, scoped, tag = 'input window, operand 0']
    #allocation3 [shape = 's32[2]{0}', space=sflag, size = 0x8, scoped, tag = 'scoped memory for tpu_custom_call.1']
    #allocation4 [shape = 's32[2]{0}', space=sflag, size = 0x8, scoped, tag = 'scoped memory for tpu_custom_call.1']
    #allocation5 [shape = 'u8[8192]{0}', space=vmem, size = 0x2000, scoped, tag = 'output window, operand 0']
    %8 = vsyncpa [#allocation3], 0
    %s9 = scalar_lea.sflag [#allocation3], 1
    %10 = vsyncpa %s9, 0
    %11 = vsyncpa [#allocation4], 0
    %s12 = scalar_lea.sflag [#allocation4], 1
    %13 = vsyncpa %s12, 0
    loop: start=0, step=1, limit=4
    $region2: #{tpu_custom_call.1} parent=1 // loop_pre_header
      _
    $region3: #{tpu_custom_call.1} parent=1 // loop_header
      %s15 = sphi 0, %s19
      %p16 = scmp.ge.s32.totalorder %s15, 4
      %s22 = sphi 0, %s34
      %s23 = sphi 0, %s30
      %s24 = sphi 0, %s22
      %s25 = sphi 0, %s23
      %s26 = sphi 0, %s24
      %s27 = sphi 0, %s25
      %s39 = sphi 0, %s41
      %s42 = sphi 0, %s39
      %s43 = sphi 0, %s42
      %s59 = sphi 0, %s43
      %s63 = sphi 0, %s63
      %s65 = sphi 0, %s63
      %s66 = sphi 0, %s65
      %s80 = sphi 0, %s66
      %s84 = sphi 0, %s84
      %s86 = sphi 0, %s84
      %s87 = sphi 0, %s86
      %s101 = sphi 0, %s87
      %s109 = sphi 0, %s111
      %s112 = sphi 0, %s109
      %s113 = sphi 0, %s112
      %s129 = sphi 0, %s113
    $region4: #{tpu_custom_call.1} parent=1 // loop_header_branch
      %18 = sbr.rel (%p16) target = $region8
    $region5: #{tpu_custom_call.1} parent=1 // loop_body
      %s20 = ssub.s32 %s15, 1
      %s21 = ssub.s32 %s15, 2
      %s28 = sadd.s32 1, %s23
      %p29 = scmp.ge.s32.totalorder %s28, 1
      %s30 = scalar_select %p29, 0, %s28
      %s31 = sadd.s32 1, %s22
      %s32 = scalar_select %p29, %s31, %s22
      %p33 = scmp.ge.s32.totalorder %s32, 2
      %s34 = scalar_select %p33, 0, %s32
      %s35 = ssub.s32 %s22, %s34
      %s36 = ssub.s32 %s23, %s30
      %s37 = sor.u32 %s35, %s36
      %p38 = scmp.eq.s32.totalorder %s37, 0
      %s40 = sadd.s32 %s39, 1
      %s41 = scalar_select %p38, %s39, %s40
      %p44 = pneg %p38
      %p45 = scmp.eq.s32.totalorder %s15, 1
      %p46 = por %p44, %p45
      %p47 = scmp.ne.s32.totalorder %s39, %s42
      %p48 = scmp.eq.s32.totalorder %s15, 0
      %p49 = por %p47, %p48
      %p50 = scmp.ne.s32.totalorder %s39, %s42
      %p51 = scmp.eq.s32.totalorder %s20, 1
      %p52 = por %p50, %p51
      %p53 = scmp.ne.s32.totalorder %s42, %s43
      %p54 = scmp.eq.s32.totalorder %s20, 0
      %p55 = por %p53, %p54
      %p56 = scmp.ne.s32.totalorder %s42, %s43
      %p57 = scmp.eq.s32.totalorder %s21, 1
      %p58 = por %p56, %p57
      %p60 = scmp.ne.s32.totalorder %s43, %s59
      %p61 = scmp.eq.s32.totalorder %s21, 0
      %p62 = por %p60, %p61
      %s64 = sadd.s32 %s63, 1
      %p67 = scmp.eq.s32.totalorder %s15, 1
      %p68 = scmp.ne.s32.totalorder %s63, %s65
      %p69 = scmp.eq.s32.totalorder %s15, 0
      %p70 = por %p68, %p69
      %p71 = scmp.ne.s32.totalorder %s63, %s65
      %p72 = scmp.eq.s32.totalorder %s20, 1
      %p73 = por %p71, %p72
      %p74 = scmp.ne.s32.totalorder %s65, %s66
      %p75 = scmp.eq.s32.totalorder %s20, 0
      %p76 = por %p74, %p75
      %p77 = scmp.ne.s32.totalorder %s65, %s66
      %p78 = scmp.eq.s32.totalorder %s21, 1
      %p79 = por %p77, %p78
      %p81 = scmp.ne.s32.totalorder %s66, %s80
      %p82 = scmp.eq.s32.totalorder %s21, 0
      %p83 = por %p81, %p82
      %s85 = sadd.s32 %s84, 1
      %p88 = scmp.eq.s32.totalorder %s15, 1
      %p89 = scmp.ne.s32.totalorder %s84, %s86
      %p90 = scmp.eq.s32.totalorder %s15, 0
      %p91 = por %p89, %p90
      %p92 = scmp.ne.s32.totalorder %s84, %s86
      %p93 = scmp.eq.s32.totalorder %s20, 1
      %p94 = por %p92, %p93
      %p95 = scmp.ne.s32.totalorder %s86, %s87
      %p96 = scmp.eq.s32.totalorder %s20, 0
      %p97 = por %p95, %p96
      %p98 = scmp.ne.s32.totalorder %s86, %s87
      %p99 = scmp.eq.s32.totalorder %s21, 1
      %p100 = por %p98, %p99
      %p102 = scmp.ne.s32.totalorder %s87, %s101
      %p103 = scmp.eq.s32.totalorder %s21, 0
      %p104 = por %p102, %p103
      %s105 = ssub.s32 %s22, %s34
      %s106 = ssub.s32 %s23, %s30
      %s107 = sor.u32 %s105, %s106
      %p108 = scmp.eq.s32.totalorder %s107, 0
      %s110 = sadd.s32 %s109, 1
      %s111 = scalar_select %p108, %s109, %s110
      %p114 = pneg %p108
      %p115 = scmp.eq.s32.totalorder %s15, 1
      %p116 = por %p114, %p115
      %p117 = scmp.ne.s32.totalorder %s109, %s112
      %p118 = scmp.eq.s32.totalorder %s15, 0
      %p119 = por %p117, %p118
      %p120 = scmp.ne.s32.totalorder %s109, %s112
      %p121 = scmp.eq.s32.totalorder %s20, 1
      %p122 = por %p120, %p121
      %p123 = scmp.ne.s32.totalorder %s112, %s113
      %p124 = scmp.eq.s32.totalorder %s20, 0
      %p125 = por %p123, %p124
      %p126 = scmp.ne.s32.totalorder %s112, %s113
      %p127 = scmp.eq.s32.totalorder %s21, 1
      %p128 = por %p126, %p127
      %p130 = scmp.ne.s32.totalorder %s113, %s129
      %p131 = scmp.eq.s32.totalorder %s21, 0
      %p132 = por %p130, %p131
      %p133 = scmp.le.s32.totalorder 1, %s15
      %p134 = scmp.lt.s32.totalorder %s15, 3
      %p135 = pnand %p133, %p134
      %p136 = pneg %p135
      // Predicated region
      $region9: #{tpu_custom_call.1} parent=5 // pred_check
        _
      $region10: #{tpu_custom_call.1} parent=5 // pred_check_branch
        %138 = sbr.rel (%p135) target = $region12
      $region11: #{tpu_custom_call.1} parent=5 // pred_region
        %s139 = ssub.s32 %s15, 1
        // Predicated region
        $region13: #{tpu_custom_call.1} parent=11 // pred_check
          %p140 = pneg %p76
        $region14: #{tpu_custom_call.1} parent=11 // pred_check_branch
          %142 = sbr.rel (%p140) target = $region16
        $region15: #{tpu_custom_call.1} parent=11 // pred_region
          _
        $region16: #{tpu_custom_call.1} parent=11 // pred_fallthru
          _
        // Predicated region
        $region17: #{tpu_custom_call.1} parent=11 // pred_check
          %p143 = pneg %p97
        $region18: #{tpu_custom_call.1} parent=11 // pred_check_branch
          %145 = sbr.rel (%p143) target = $region20
        $region19: #{tpu_custom_call.1} parent=11 // pred_region
          _
        $region20: #{tpu_custom_call.1} parent=11 // pred_fallthru
          _
      $region12: #{tpu_custom_call.1} parent=5 // pred_fallthru
        _
      %p146 = scmp.lt.s32.totalorder %s15, 2
      // Predicated region
      $region21: #{tpu_custom_call.1} parent=5 // pred_check
        %p147 = pneg %p146
      $region22: #{tpu_custom_call.1} parent=5 // pred_check_branch
        %149 = sbr.rel (%p147) target = $region24
      $region23: #{tpu_custom_call.1} parent=5 // pred_region
        // Predicated region
        $region25: #{tpu_custom_call.1} parent=23 // pred_check
          %p150 = pneg %p49
        $region26: #{tpu_custom_call.1} parent=23 // pred_check_branch
          %152 = sbr.rel (%p150) target = $region28
        $region27: #{tpu_custom_call.1} parent=23 // pred_region
          %s153 = sand.u32 %s39, 1
          %s154 = scalar_lea.sflag [#allocation3], %s153
          %s155 = sand.u32 %s39, 1
          %s156 = smul.addr %s155, 16
          %s157 = scalar_lea.vmem [#allocation2], %s156
          %s158 = smul.u32 2, %s23
          %160 = vsyncadd %s154, 0
          %s161 = smul.addr %s22, 2
          %s162 = sadd.s32 %s158, %s161
          %s163 = smul.addr %s162, 8
          %s164 = scalar_lea.hbm %s0, %s163
          %s166 = sshll.u32 %s164, 4
          %s167 = int_to_ptr.hbm [resolvable:$true] %s166
          %s168 = sshll.u32 %s157, 4
          %s169 = int_to_ptr.vmem [resolvable:$true] %s168
          %171 = dma.hbm_to_vmem [thread:$0]  %s167, 256, %s169, %s154
        $region28: #{tpu_custom_call.1} parent=23 // pred_fallthru
          _
      $region24: #{tpu_custom_call.1} parent=5 // pred_fallthru
        _
      %p172 = scmp.le.s32.totalorder 1, %s15
      %p173 = scmp.lt.s32.totalorder %s15, 3
      %p174 = pnand %p172, %p173
      %p175 = pneg %p174
      // Predicated region
      $region29: #{tpu_custom_call.1} parent=5 // pred_check
        _
      $region30: #{tpu_custom_call.1} parent=5 // pred_check_branch
        %177 = sbr.rel (%p174) target = $region32
      $region31: #{tpu_custom_call.1} parent=5 // pred_region
        %s178 = ssub.s32 %s15, 1
        %s179 = sand.u32 %s42, 1
        %s180 = scalar_lea.sflag [#allocation3], %s179
        %s181 = sand.u32 %s42, 1
        %s182 = smul.addr %s181, 16
        %s183 = scalar_lea.vmem [#allocation2], %s182
        // Predicated region
        $region33: #{tpu_custom_call.1} parent=31 // pred_check
          %p184 = pneg %p55
        $region34: #{tpu_custom_call.1} parent=31 // pred_check_branch
          %186 = sbr.rel (%p184) target = $region36
        $region35: #{tpu_custom_call.1} parent=31 // pred_region
          %188 = dma.done %s180, 256
        $region36: #{tpu_custom_call.1} parent=31 // pred_fallthru
          _
        %s189 = sand.u32 %s42, 1
        %s190 = scalar_lea.sflag [#allocation3], %s189
        %s191 = sand.u32 %s42, 1
        %s192 = smul.addr %s191, 16
        %s193 = scalar_lea.vmem [#allocation2], %s192
        %p194 = pneg %p55
        %p195 = pneg %p52
        %p196 = pneg %p76
        %p197 = pneg %p73
        %p198 = pneg %p97
        %p199 = pneg %p94
        %p200 = pneg %p125
        %p201 = pneg %p122
        %s202 = sand.u32 %s112, 1
        %s203 = scalar_lea.sflag [#allocation4], %s202
        %s204 = sand.u32 %s112, 1
        %s205 = smul.addr %s204, 8
        %s206 = scalar_lea.vmem [#allocation5], %s205
        %s207 = smul.u32 2, %s25
        %s208 = smul.u32 2, %s25
        %v209 = vld [vmem:[%s183] sm:$0xff]
        %v210 = vld [vmem:[%s183 + $0x8] sm:$0xff]
        %v211 = vld [vmem:[%s1] sm:$0xf]
        %v212 = vld [vmem:[%s2] sm:$0xf]
        %214 = vset.pattern.permute.xlu0 0
        %215 = vperm.xlu0 %214, %v212
        %v216 = vpop.permute.xlu0 %215
        %219 = vset.pattern.permute.xlu0 0
        %220 = vperm.xlu0 %219, %v211
        %v221 = vpop.permute.xlu0 %220
        %v223 = vperm.slane %v209, 0
        %v224 = vperm.slane %v210, 0
        %v225 = vmul.f32 %v221, %v223
        %v226 = vmul.f32 %v221, %v224
        %v227 = vadd.f32 %v216, %v225
        %v228 = vadd.f32 %v216, %v226
        %229 = vset.pattern.permute.xlu0 1
        %230 = vperm.xlu0 %229, %v211
        %v231 = vpop.permute.xlu0 %230
        %v233 = vperm.slane %v209, 1
        %v234 = vperm.slane %v210, 1
        %v235 = vmul.f32 %v231, %v233
        %v236 = vmul.f32 %v231, %v234
        %v237 = vadd.f32 %v227, %v235
        %v238 = vadd.f32 %v228, %v236
        %239 = vset.pattern.permute.xlu0 2
        %240 = vperm.xlu0 %239, %v211
        %v241 = vpop.permute.xlu0 %240
        %v243 = vperm.slane %v209, 2
        %v244 = vperm.slane %v210, 2
        %v245 = vmul.f32 %v241, %v243
        %v246 = vmul.f32 %v241, %v244
        %v247 = vadd.f32 %v237, %v245
        %v248 = vadd.f32 %v238, %v246
        %249 = vset.pattern.permute.xlu0 3
        %250 = vperm.xlu0 %249, %v211
        %v251 = vpop.permute.xlu0 %250
        %v253 = vperm.slane %v209, 3
        %v254 = vperm.slane %v210, 3
        %v255 = vmul.f32 %v251, %v253
        %v256 = vmul.f32 %v251, %v254
        %v257 = vadd.f32 %v247, %v255
        %v258 = vadd.f32 %v248, %v256
        %259 = vset.pattern.permute.xlu0 4
        %260 = vperm.xlu0 %259, %v211
        %v261 = vpop.permute.xlu0 %260
        %v263 = vperm.slane %v209, 4
        %v264 = vperm.slane %v210, 4
        %v265 = vmul.f32 %v261, %v263
        %v266 = vmul.f32 %v261, %v264
        %v267 = vadd.f32 %v257, %v265
        %v268 = vadd.f32 %v258, %v266
        %269 = vset.pattern.permute.xlu0 5
        %270 = vperm.xlu0 %269, %v211
        %v271 = vpop.permute.xlu0 %270
        %v273 = vperm.slane %v209, 5
        %v274 = vperm.slane %v210, 5
        %v275 = vmul.f32 %v271, %v273
        %v276 = vmul.f32 %v271, %v274
        %v277 = vadd.f32 %v267, %v275
        %v278 = vadd.f32 %v268, %v276
        %279 = vset.pattern.permute.xlu0 6
        %280 = vperm.xlu0 %279, %v211
        %v281 = vpop.permute.xlu0 %280
        %v283 = vperm.slane %v209, 6
        %v284 = vperm.slane %v210, 6
        %v285 = vmul.f32 %v281, %v283
        %v286 = vmul.f32 %v281, %v284
        %v287 = vadd.f32 %v277, %v285
        %v288 = vadd.f32 %v278, %v286
        %289 = vset.pattern.permute.xlu0 7
        %290 = vperm.xlu0 %289, %v211
        %v291 = vpop.permute.xlu0 %290
        %v293 = vperm.slane %v209, 7
        %v294 = vperm.slane %v210, 7
        %v295 = vmul.f32 %v291, %v293
        %v296 = vmul.f32 %v291, %v294
        %v297 = vadd.f32 %v287, %v295
        %v298 = vadd.f32 %v288, %v296
        %v301 = vrot.slane %v298, 4
        %vm302 = vcmask 1043456
        %v303 = vsel %vm302, %v297, %v301
        %305 = vst [vmem:[%s206] sm:$0xff] %v303
        %s306 = sand.u32 %s112, 1
        %s307 = scalar_lea.sflag [#allocation4], %s306
        %s308 = sand.u32 %s112, 1
        %s309 = smul.addr %s308, 8
        %s310 = scalar_lea.vmem [#allocation5], %s309
        // Predicated region
        $region37: #{tpu_custom_call.1} parent=31 // pred_check
          %p311 = pneg %p122
        $region38: #{tpu_custom_call.1} parent=31 // pred_check_branch
          %313 = sbr.rel (%p311) target = $region40
        $region39: #{tpu_custom_call.1} parent=31 // pred_region
          %s314 = smul.u32 2, %s25
          %316 = vsyncadd %s307, 0
          %s317 = smul.addr %s24, 2
          %s318 = sadd.s32 %s314, %s317
          %s319 = smul.addr %s318, 4
          %s320 = scalar_lea.hbm %s3, %s319
          %s322 = sshll.u32 %s310, 4
          %s323 = int_to_ptr.vmem [resolvable:$true] %s322
          %s324 = sshll.u32 %s320, 4
          %s325 = int_to_ptr.hbm [resolvable:$true] %s324
          %327 = dma.vmem_to_hbm [thread:$0]  %s323, 128, %s325, %s307
        $region40: #{tpu_custom_call.1} parent=31 // pred_fallthru
          _
      $region32: #{tpu_custom_call.1} parent=5 // pred_fallthru
        _
      %p328 = scmp.le.s32.totalorder 2, %s15
      // Predicated region
      $region41: #{tpu_custom_call.1} parent=5 // pred_check
        %p329 = pneg %p328
      $region42: #{tpu_custom_call.1} parent=5 // pred_check_branch
        %331 = sbr.rel (%p329) target = $region44
      $region43: #{tpu_custom_call.1} parent=5 // pred_region
        %s332 = ssub.s32 %s15, 2
        // Predicated region
        $region45: #{tpu_custom_call.1} parent=43 // pred_check
          %p333 = pneg %p128
        $region46: #{tpu_custom_call.1} parent=43 // pred_check_branch
          %335 = sbr.rel (%p333) target = $region48
        $region47: #{tpu_custom_call.1} parent=43 // pred_region
          %s336 = sand.u32 %s113, 1
          %s337 = scalar_lea.sflag [#allocation4], %s336
          %s338 = sand.u32 %s113, 1
          %s339 = smul.addr %s338, 8
          %s340 = scalar_lea.vmem [#allocation5], %s339
          %342 = dma.done %s337, 128
        $region48: #{tpu_custom_call.1} parent=43 // pred_fallthru
          _
      $region44: #{tpu_custom_call.1} parent=5 // pred_fallthru
        _
    $region6: #{tpu_custom_call.1} parent=1 // loop_footer
      %s19 = sadd.s32 1, %s15
    $region7: #{tpu_custom_call.1} parent=1 // loop_footer_branch
      %14 = sbr.rel target = $region3
    $region8: #{tpu_custom_call.1} parent=1 // loop_exit
      _
    %343 = vsyncpa [#allocation3], 1
    %s344 = scalar_lea.sflag [#allocation3], 1
    %345 = vsyncpa %s344, 1
    %346 = vsyncpa [#allocation4], 1
    %s347 = scalar_lea.sflag [#allocation4], 1
    %348 = vsyncpa %s347, 1

</llo_original>
